<compile_context>
chip_gen: v7x
topology: tpu7x:2x2x1
jax: 0.10.0
libtpu: 0.0.40
codegen_flags: <defaults>
</compile_context>

<pallas_src>
import functools

import numpy as np
import jax
import jax.numpy as jnp
from jax.experimental import pallas as pl
from jax.experimental.pallas import tpu as pltpu


# ----------------------------- interpolation matrices -----------------------

def _interp_matrix(out_size, in_size):
    """PyTorch bilinear (align_corners=False) interpolation matrix (out, in)."""
    A = np.zeros((out_size, in_size), np.float32)
    scale = in_size / out_size
    for i in range(out_size):
        src = max((i + 0.5) * scale - 0.5, 0.0)
        i0 = min(int(np.floor(src)), in_size - 1)
        i1 = min(i0 + 1, in_size - 1)
        w1 = src - i0
        A[i, i0] += 1.0 - w1
        A[i, i1] += w1
    return jnp.asarray(A)


# ----------------------------- Pallas kernel --------------------------------

def _upsample_kernel(x_ref, ah_ref, awt_ref, o_ref):
    # x_ref:   (BP, H, W)     block of input planes
    # ah_ref:  (THO, H)       H-interp rows for this Ho tile
    # awt_ref: (W, Wo)        W-interp matrix (transposed), resident across grid
    # o_ref:   (BP, THO, Wo)  output block (lane-dense in Wo)
    bp, h, w = x_ref.shape
    tho = ah_ref.shape[0]
    wo = awt_ref.shape[1]

    # (1) W-upsample first: one big lane-dense MXU matmul over the whole plane
    #     block.  The (BP,H,W)->(BP*H,W) collapse is a free re-tiling when
    #     H % 8 == 0 (the wrapper forces BP=1 otherwise so it stays trivial).
    y = jnp.dot(x_ref[...].reshape(bp * h, w), awt_ref[...],
                preferred_element_type=jnp.float32)          # (BP*H, Wo)
    y = y.reshape(bp, h, wo)                                  # (BP, H, Wo)

    # (2) H-upsample: batched (over planes) matmul; output lane-dense in Wo.
    ah = jnp.broadcast_to(ah_ref[...][None, :, :], (bp, tho, h))
    o_ref[...] = jax.lax.dot_general(
        ah, y,
        dimension_numbers=(((2,), (1,)), ((0,), (0,))),
        preferred_element_type=jnp.float32)                   # (BP, THO, Wo)


# ----------------------------- wrapper ---------------------------------------

def _largest_divisor_leq(n, cap):
    cap = max(1, min(n, cap))
    for d in range(cap, 0, -1):
        if n % d == 0:
            return d
    return 1


def _vmem_capacity_bytes():
    try:
        return int(pltpu.get_tpu_info().vmem_capacity_bytes)
    except Exception:
        # Most conservative per-TensorCore figure (v7x physical VMEM).
        return 64 * 1024 * 1024


def bilinear_upsample_x8_nchw(x):
    """x: (N, C, H, W) -> (N, C, 8H, 8W), PyTorch bilinear align_corners=False."""
    N, C, H, W = x.shape
    Ho, Wo = 8 * H, 8 * W
    P = N * C
    xr = x.reshape(P, H, W).astype(jnp.float32)          # free reshape (contiguous)

    Ah = _interp_matrix(Ho, H)                            # (Ho, H)
    AwT = jnp.transpose(_interp_matrix(Wo, W))            # (W, Wo)

    # --- VMEM budget, per hardware generation --------------------------------
    vmem_cap = _vmem_capacity_bytes()                     # 128 MiB v5e/v6e, 64 MiB v7x
    usable = min(vmem_cap * 3 // 4, 96 * 1024 * 1024)     # headroom for scratch
    awt_bytes = W * Wo * 4
    # TODO(synk): for very large W (>~512) band/tile AwT (it is 32*W^2 bytes and
    # has <=2 nonzeros per column) instead of keeping the full matrix resident.
    out_block_budget = max(1 << 20,
                           min((usable - 2 * awt_bytes) // 3, 16 * 1024 * 1024))

    # --- pick (THO, BP): 2x out block + 2x in block + tiles must fit ---------
    plane_out_bytes = Ho * Wo * 4
    if plane_out_bytes <= out_block_budget:
        THO = Ho                                          # whole plane per step,
        bp_cap = max(1, out_block_budget // plane_out_bytes)  # y computed once
    else:
        bp_cap = 1
        d = _largest_divisor_leq(H, max(1, out_block_budget // (8 * Wo * 4)))
        THO = 8 * d                                       # THO | Ho, sublane aligned

    # Megacore (v7x): keep >= 2 parallel grid steps so both TCs get work.
    if Ho // THO == 1 and P >= 2:
        bp_cap = min(bp_cap, max(1, P // 2))
    # Keep the in-kernel (BP,H,W)->(BP*H,W) reshape a free re-tiling.
    if H % 8 != 0:
        bp_cap = 1

    BP = _largest_divisor_leq(P, bp_cap)
    P_pad = P
    if BP < bp_cap:
        # Prime-ish plane counts: pad P instead of collapsing BP to 1, as long
        # as the padded planes add <= 12.5% extra output traffic.
        cand = min(bp_cap, P)
        padded = pl.cdiv(P, cand) * cand
        if (padded - P) * 8 <= P:
            BP, P_pad = cand, padded
    if P_pad != P:
        xr = jnp.pad(xr, ((0, P_pad - P), (0, 0), (0, 0)))

    # If the whole problem still collapsed to one grid step, split the Ho axis.
    if P_pad // BP == 1 and Ho // THO == 1 and H >= 2:
        d = _largest_divisor_leq(H, max(1, H // 2))
        THO = 8 * d

    # Ho tiles are the trailing (innermost) grid dim: the x index_map is
    # constant in j, so the input is DMA'd from HBM exactly once.
    grid = (P_pad // BP, Ho // THO)

    # TODO(synk): for W < 16 (Wo < 128) the output stores become masked
    # vst.msk; fold BP/THO into the lane dim if such tiny feature maps matter.

    cost = pl.CostEstimate(
        flops=int(2 * P_pad * H * W * Wo * grid[1] + 2 * P_pad * Ho * H * Wo),
        transcendentals=0,
        bytes_accessed=int(4 * (P_pad * H * W + P_pad * Ho * Wo
                                + Ho * H + W * Wo)),
    )

    out = pl.pallas_call(
        _upsample_kernel,
        out_shape=jax.ShapeDtypeStruct((P_pad, Ho, Wo), jnp.float32),
        grid=grid,
        in_specs=[
            pl.BlockSpec((BP, H, W), lambda i, j: (i, 0, 0)),
            pl.BlockSpec((THO, H), lambda i, j: (j, 0)),
            pl.BlockSpec((W, Wo), lambda i, j: (0, 0)),
        ],
        out_specs=pl.BlockSpec((BP, THO, Wo), lambda i, j: (i, j, 0)),
        compiler_params=pltpu.CompilerParams(
            dimension_semantics=("parallel", "parallel"),
            vmem_limit_bytes=int(usable)),
        cost_estimate=cost,
    )(xr, Ah, AwT)

    if P_pad != P:
        out = out[:P]
    return out.reshape(N, C, Ho, Wo)


def decoder_forward(x_nchw):
    """Forward pass of the PyTorch `Decoder` module (num_classes is unused there)."""
    return bilinear_upsample_x8_nchw(x_nchw)


# ----------------------------- reference & test ------------------------------

def _ref_bilinear_x8_nchw(x_np):
    """NumPy reference implementing PyTorch's align_corners=False bilinear x8."""
    N, C, H, W = x_np.shape
    Ho, Wo = 8 * H, 8 * W

    def src_idx(out_size, in_size):
        i = np.arange(out_size, dtype=np.float64)
        s = np.maximum((i + 0.5) * (in_size / out_size) - 0.5, 0.0)
        i0 = np.minimum(np.floor(s).astype(np.int64), in_size - 1)
        i1 = np.minimum(i0 + 1, in_size - 1)
        return i0, i1, (s - i0).astype(np.float32)

    h0, h1, fh = src_idx(Ho, H)
    w0, w1, fw = src_idx(Wo, W)
    xh0 = x_np[:, :, h0, :]
    xh1 = x_np[:, :, h1, :]
    top = xh0[:, :, :, w0] * (1.0 - fw) + xh0[:, :, :, w1] * fw
    bot = xh1[:, :, :, w0] * (1.0 - fw) + xh1[:, :, :, w1] * fw
    return top * (1.0 - fh)[:, None] + bot * fh[:, None]


if __name__ == "__main__":
    key = jax.random.PRNGKey(0)
    # NCHW input, e.g. a num_classes=4 logit map at 16x16 -> upsampled to 128x128.
    x = jax.random.normal(key, (2, 4, 16, 16), jnp.float32)

    fwd = jax.jit(decoder_forward)
    out = jax.block_until_ready(fwd(x))

    assert out.shape == (2, 4, 128, 128), out.shape
    assert bool(jnp.all(jnp.isfinite(out)))

    ref = _ref_bilinear_x8_nchw(np.asarray(x))
    assert np.allclose(np.asarray(out), ref, rtol=1e-4, atol=1e-4)

    print("KERNEL_OK")
</pallas_src>

<mosaic_0001>
module attributes {stable_mosaic.version = 11 : i64} {
  func.func @_upsample_kernel(%arg0: i32, %arg1: i32, %arg2: memref<4x16x16xf32, #tpu.memory_space<vmem>>, %arg3: memref<128x16xf32, #tpu.memory_space<vmem>>, %arg4: memref<16x128xf32, #tpu.memory_space<vmem>>, %arg5: memref<4x128x128xf32, #tpu.memory_space<vmem>>) attributes {dimension_semantics = [#tpu.dimension_semantics<parallel>, #tpu.dimension_semantics<parallel>], iteration_bounds = array<i64: 2, 1>, scalar_prefetch = 0 : i64, scratch_operands = 0 : i64, tpu.core_type = #tpu.core_type<tc>, window_params = [{transform_indices = @transform_0, window_bounds = array<i64: 4, 16, 16>}, {transform_indices = @transform_1, window_bounds = array<i64: 128, 16>}, {pipeline_mode = #tpu.pipeline_mode<synchronous>, transform_indices = @transform_2, window_bounds = array<i64: 16, 128>}, {transform_indices = @transform_3, window_bounds = array<i64: 4, 128, 128>}]} {
    %c0 = arith.constant 0 : index
    %c0_0 = arith.constant 0 : index
    %c0_1 = arith.constant 0 : index
    %0 = vector.load %arg2[%c0, %c0_0, %c0_1] : memref<4x16x16xf32, #tpu.memory_space<vmem>>, vector<4x16x16xf32>
    %1 = vector.shape_cast %0 : vector<4x16x16xf32> to vector<64x16xf32>
    %c0_2 = arith.constant 0 : index
    %c0_3 = arith.constant 0 : index
    %2 = vector.load %arg4[%c0_2, %c0_3] : memref<16x128xf32, #tpu.memory_space<vmem>>, vector<16x128xf32>
    %cst = arith.constant dense<0.000000e+00> : vector<64x128xf32>
    %3 = tpu.matmul %1, %2, %cst {dimension_numbers = #tpu.dot_dimension_numbers<[1], [0], [0], [1], [0, 0, 1, 1], [], []>} : vector<64x16xf32>, vector<16x128xf32>, vector<64x128xf32> -> vector<64x128xf32>
    %4 = vector.shape_cast %3 : vector<64x128xf32> to vector<4x16x128xf32>
    %c0_4 = arith.constant 0 : index
    %c0_5 = arith.constant 0 : index
    %5 = vector.load %arg3[%c0_4, %c0_5] : memref<128x16xf32, #tpu.memory_space<vmem>>, vector<128x16xf32>
    %6 = vector.shape_cast %5 : vector<128x16xf32> to vector<1x128x16xf32>
    %7 = vector.shape_cast %6 : vector<1x128x16xf32> to vector<1x128x16xf32>
    %8 = vector.broadcast %7 : vector<1x128x16xf32> to vector<4x128x16xf32>
    %cst_6 = arith.constant dense<0.000000e+00> : vector<4x128x128xf32>
    %9 = tpu.matmul %8, %4, %cst_6 {dimension_numbers = #tpu.dot_dimension_numbers<[2], [1], [1], [2], [0, 0, 0, 1, 1, 2], [0], [0]>} : vector<4x128x16xf32>, vector<4x16x128xf32>, vector<4x128x128xf32> -> vector<4x128x128xf32>
    %c0_7 = arith.constant 0 : index
    %c0_8 = arith.constant 0 : index
    %c0_9 = arith.constant 0 : index
    %10 = vector.load %arg5[%c0_7, %c0_8, %c0_9] : memref<4x128x128xf32, #tpu.memory_space<vmem>>, vector<4x128x128xf32>
    tpu.vector_store %arg5[%c0_7, %c0_8, %c0_9], %9 {strides = array<i32>} : memref<4x128x128xf32, #tpu.memory_space<vmem>>, vector<4x128x128xf32>,
    return
  }
  func.func @transform_0(%arg0: i32, %arg1: i32) -> (i32, i32, i32) {
    %c0_i32 = arith.constant 0 : i32
    %c0_i32_0 = arith.constant 0 : i32
    %c0_i32_1 = arith.constant 0 : i32
    return %arg0, %c0_i32, %c0_i32_0 : i32, i32, i32
  }
  func.func @transform_1(%arg0: i32, %arg1: i32) -> (i32, i32) {
    %c0_i32 = arith.constant 0 : i32
    %c0_i32_0 = arith.constant 0 : i32
    return %arg1, %c0_i32 : i32, i32
  }
  func.func @transform_2(%arg0: i32, %arg1: i32) -> (i32, i32) {
    %c0_i32 = arith.constant 0 : i32
    %c0_i32_0 = arith.constant 0 : i32
    %c0_i32_1 = arith.constant 0 : i32
    return %c0_i32, %c0_i32_0 : i32, i32
  }
  func.func @transform_3(%arg0: i32, %arg1: i32) -> (i32, i32, i32) {
    %c0_i32 = arith.constant 0 : i32
    %c0_i32_0 = arith.constant 0 : i32
    return %arg0, %arg1, %c0_i32 : i32, i32, i32
  }
}

</mosaic_0001>

<llo_original>
// kernel: decoder_forward.1
$region0: #{decoder_forward.1}
  #allocation0 [shape = 'u32[]', space=smem, size = 0x4, offset = 0x4, fixed_abs, tag = 'smem constant byte address 0x4 - core index']
  #allocation1 [shape = 'u32[144,128]{1,0:T(1,128)}', space=vmem, size = 0x12000, scoped, tag = 'internal scratch']
  %s0 = inlined_call_operand.hbm [shape: f32[8,16,16], index: 0, kind: input, shape index: {}]
  %s1 = inlined_call_operand.hbm [shape: f32[128,16], index: 1, kind: input, shape index: {}]
  %s2 = inlined_call_operand.hbm [shape: f32[16,128], index: 2, kind: input, shape index: {}]
  %s3 = inlined_call_operand.hbm [shape: f32[8,128,128], index: 3, kind: output, shape index: {}]
  %s4 = sld [smem:[#allocation0]]
  $region57: #{decoder_forward.1} parent=0
    _
  %s6 = ssub.s32 1, %s4
  %s7 = scalar_select 0, %s6, %s4
  $region1: #{decoder_forward.1} parent=0
    #allocation2 [shape = 'u8[65536]{0}', space=vmem, size = 0x10000, scoped, tag = 'input window, operand 0']
    #allocation3 [shape = 's32[2]{0}', space=sflag, size = 0x8, scoped, tag = 'scoped memory for decoder_forward.1']
    #allocation4 [shape = 's32[2]{0}', space=sflag, size = 0x8, scoped, tag = 'scoped memory for decoder_forward.1']
    #allocation5 [shape = 'u8[65536]{0}', space=vmem, size = 0x10000, scoped, tag = 'input window, operand 1, single buffered']
    #allocation6 [shape = 's32[1]{0}', space=sflag, size = 0x4, scoped, tag = 'scoped memory for decoder_forward.1']
    #allocation7 [shape = 'u8[8192]{0}', space=vmem, size = 0x2000, scoped, tag = 'input window, operand 2, single buffered']
    #allocation8 [shape = 'u8[524288]{0}', space=vmem, size = 0x80000, scoped, tag = 'output window, operand 0']
    %8 = vsyncpa [#allocation3], 0
    %s9 = scalar_lea.sflag [#allocation3], 1
    %10 = vsyncpa %s9, 0
    %11 = vsyncpa [#allocation6], 0
    %12 = vsyncpa [#allocation4], 0
    %s13 = scalar_lea.sflag [#allocation4], 1
    %14 = vsyncpa %s13, 0
    loop: start=0, step=1, limit=4
    $region2: #{decoder_forward.1} parent=1 // loop_pre_header
      _
    $region3: #{decoder_forward.1} parent=1 // loop_header
      %s16 = sphi 0, %s20
      %p17 = scmp.ge.s32.totalorder %s16, 4
      %s23 = sphi 0, %s35
      %s24 = sphi 0, %s31
      %s25 = sphi 0, %s23
      %s26 = sphi 0, %s24
      %s27 = sphi 0, %s25
      %s28 = sphi 0, %s26
      %s38 = sphi 0, %s40
      %s41 = sphi 0, %s38
      %s42 = sphi 0, %s41
      %s58 = sphi 0, %s42
      %s64 = sphi 0, %s66
      %s67 = sphi 0, %s64
      %s68 = sphi 0, %s67
      %s84 = sphi 0, %s68
      %s88 = sphi 0, %s88
      %s90 = sphi 0, %s88
      %s91 = sphi 0, %s90
      %s105 = sphi 0, %s91
      %s113 = sphi 0, %s115
      %s116 = sphi 0, %s113
      %s117 = sphi 0, %s116
      %s133 = sphi 0, %s117
    $region4: #{decoder_forward.1} parent=1 // loop_header_branch
      %19 = sbr.rel (%p17) target = $region8
    $region5: #{decoder_forward.1} parent=1 // loop_body
      %s21 = ssub.s32 %s16, 1
      %s22 = ssub.s32 %s16, 2
      %s29 = sadd.s32 1, %s24
      %p30 = scmp.ge.s32.totalorder %s29, 1
      %s31 = scalar_select %p30, 0, %s29
      %s32 = sadd.s32 1, %s23
      %s33 = scalar_select %p30, %s32, %s23
      %p34 = scmp.ge.s32.totalorder %s33, 2
      %s35 = scalar_select %p34, 0, %s33
      %s36 = ssub.s32 %s23, %s35
      %p37 = scmp.eq.s32.totalorder %s36, 0
      %s39 = sadd.s32 %s38, 1
      %s40 = scalar_select %p37, %s38, %s39
      %p43 = pneg %p37
      %p44 = scmp.eq.s32.totalorder %s16, 1
      %p45 = por %p43, %p44
      %p46 = scmp.ne.s32.totalorder %s38, %s41
      %p47 = scmp.eq.s32.totalorder %s16, 0
      %p48 = por %p46, %p47
      %p49 = scmp.ne.s32.totalorder %s38, %s41
      %p50 = scmp.eq.s32.totalorder %s21, 1
      %p51 = por %p49, %p50
      %p52 = scmp.ne.s32.totalorder %s41, %s42
      %p53 = scmp.eq.s32.totalorder %s21, 0
      %p54 = por %p52, %p53
      %p55 = scmp.ne.s32.totalorder %s41, %s42
      %p56 = scmp.eq.s32.totalorder %s22, 1
      %p57 = por %p55, %p56
      %p59 = scmp.ne.s32.totalorder %s42, %s58
      %p60 = scmp.eq.s32.totalorder %s22, 0
      %p61 = por %p59, %p60
      %s62 = ssub.s32 %s24, %s31
      %p63 = scmp.eq.s32.totalorder %s62, 0
      %s65 = sadd.s32 %s64, 1
      %s66 = scalar_select %p63, %s64, %s65
      %p69 = pneg %p63
      %p70 = scmp.eq.s32.totalorder %s16, 1
      %p71 = por %p69, %p70
      %p72 = scmp.ne.s32.totalorder %s64, %s67
      %p73 = scmp.eq.s32.totalorder %s16, 0
      %p74 = por %p72, %p73
      %p75 = scmp.ne.s32.totalorder %s64, %s67
      %p76 = scmp.eq.s32.totalorder %s21, 1
      %p77 = por %p75, %p76
      %p78 = scmp.ne.s32.totalorder %s67, %s68
      %p79 = scmp.eq.s32.totalorder %s21, 0
      %p80 = por %p78, %p79
      %p81 = scmp.ne.s32.totalorder %s67, %s68
      %p82 = scmp.eq.s32.totalorder %s22, 1
      %p83 = por %p81, %p82
      %p85 = scmp.ne.s32.totalorder %s68, %s84
      %p86 = scmp.eq.s32.totalorder %s22, 0
      %p87 = por %p85, %p86
      %s89 = sadd.s32 %s88, 1
      %p92 = scmp.eq.s32.totalorder %s16, 1
      %p93 = scmp.ne.s32.totalorder %s88, %s90
      %p94 = scmp.eq.s32.totalorder %s16, 0
      %p95 = por %p93, %p94
      %p96 = scmp.ne.s32.totalorder %s88, %s90
      %p97 = scmp.eq.s32.totalorder %s21, 1
      %p98 = por %p96, %p97
      %p99 = scmp.ne.s32.totalorder %s90, %s91
      %p100 = scmp.eq.s32.totalorder %s21, 0
      %p101 = por %p99, %p100
      %p102 = scmp.ne.s32.totalorder %s90, %s91
      %p103 = scmp.eq.s32.totalorder %s22, 1
      %p104 = por %p102, %p103
      %p106 = scmp.ne.s32.totalorder %s91, %s105
      %p107 = scmp.eq.s32.totalorder %s22, 0
      %p108 = por %p106, %p107
      %s109 = ssub.s32 %s23, %s35
      %s110 = ssub.s32 %s24, %s31
      %s111 = sor.u32 %s109, %s110
      %p112 = scmp.eq.s32.totalorder %s111, 0
      %s114 = sadd.s32 %s113, 1
      %s115 = scalar_select %p112, %s113, %s114
      %p118 = pneg %p112
      %p119 = scmp.eq.s32.totalorder %s16, 1
      %p120 = por %p118, %p119
      %p121 = scmp.ne.s32.totalorder %s113, %s116
      %p122 = scmp.eq.s32.totalorder %s16, 0
      %p123 = por %p121, %p122
      %p124 = scmp.ne.s32.totalorder %s113, %s116
      %p125 = scmp.eq.s32.totalorder %s21, 1
      %p126 = por %p124, %p125
      %p127 = scmp.ne.s32.totalorder %s116, %s117
      %p128 = scmp.eq.s32.totalorder %s21, 0
      %p129 = por %p127, %p128
      %p130 = scmp.ne.s32.totalorder %s116, %s117
      %p131 = scmp.eq.s32.totalorder %s22, 1
      %p132 = por %p130, %p131
      %p134 = scmp.ne.s32.totalorder %s117, %s133
      %p135 = scmp.eq.s32.totalorder %s22, 0
      %p136 = por %p134, %p135
      %p137 = scmp.le.s32.totalorder 1, %s16
      %p138 = scmp.lt.s32.totalorder %s16, 3
      %p139 = pnand %p137, %p138
      %p140 = pneg %p139
      // Predicated region
      $region9: #{decoder_forward.1} parent=5 // pred_check
        _
      $region10: #{decoder_forward.1} parent=5 // pred_check_branch
        %142 = sbr.rel (%p139) target = $region12
      $region11: #{decoder_forward.1} parent=5 // pred_region
        %s143 = ssub.s32 %s16, 1
        // Predicated region
        $region13: #{decoder_forward.1} parent=11 // pred_check
          %p144 = pneg %p80
        $region14: #{decoder_forward.1} parent=11 // pred_check_branch
          %146 = sbr.rel (%p144) target = $region16
        $region15: #{decoder_forward.1} parent=11 // pred_region
          %s147 = smul.u32 16, %s26
          %s149 = ssub.s32 2048, 2048
          %150 = vsyncadd [#allocation6], %s149
          %s151 = smul.addr %s147, 128
          %s152 = scalar_lea.hbm %s1, %s151
          %s153 = sshll.u32 [#allocation5], 4
          %s154 = int_to_ptr.vmem [resolvable:$true] %s153
          %159 = dma.hbm_to_vmem [thread:$0]  %s152, 2048, %s154, [#allocation6], 128, 128, 8
        $region16: #{decoder_forward.1} parent=11 // pred_fallthru
          _
        // Predicated region
        $region17: #{decoder_forward.1} parent=11 // pred_check
          %p160 = pneg %p101
        $region18: #{decoder_forward.1} parent=11 // pred_check_branch
          %162 = sbr.rel (%p160) target = $region20
        $region19: #{decoder_forward.1} parent=11 // pred_region
          %s164 = ssub.s32 256, 256
          %165 = vsyncadd [#allocation6], %s164
          %s166 = sshll.u32 [#allocation7], 4
          %s167 = int_to_ptr.vmem [resolvable:$true] %s166
          %172 = dma.hbm_to_vmem [thread:$0]  %s2, 256, %s167, [#allocation6], 128, 128, 8
        $region20: #{decoder_forward.1} parent=11 // pred_fallthru
          _
      $region12: #{decoder_forward.1} parent=5 // pred_fallthru
        _
      %p173 = scmp.lt.s32.totalorder %s16, 2
      // Predicated region
      $region21: #{decoder_forward.1} parent=5 // pred_check
        %p174 = pneg %p173
      $region22: #{decoder_forward.1} parent=5 // pred_check_branch
        %176 = sbr.rel (%p174) target = $region24
      $region23: #{decoder_forward.1} parent=5 // pred_region
        // Predicated region
        $region25: #{decoder_forward.1} parent=23 // pred_check
          %p177 = pneg %p48
        $region26: #{decoder_forward.1} parent=23 // pred_check_branch
          %179 = sbr.rel (%p177) target = $region28
        $region27: #{decoder_forward.1} parent=23 // pred_region
          %s180 = sand.u32 %s38, 1
          %s181 = scalar_lea.sflag [#allocation3], %s180
          %s182 = sand.u32 %s38, 1
          %s183 = smul.addr %s182, 64
          %s184 = scalar_lea.vmem [#allocation2], %s183
          %s185 = smul.u32 4, %s23
          %s187 = ssub.s32 1024, 1024
          %188 = vsyncadd %s181, %s187
          %s189 = smul.addr %s185, 2
          %s190 = smul.addr %s189, 128
          %s191 = scalar_lea.hbm %s0, %s190
          %s192 = sshll.u32 %s184, 4
          %s193 = int_to_ptr.vmem [resolvable:$true] %s192
          %198 = dma.hbm_to_vmem [thread:$0]  %s191, 1024, %s193, %s181, 128, 128, 8
        $region28: #{decoder_forward.1} parent=23 // pred_fallthru
          _
      $region24: #{decoder_forward.1} parent=5 // pred_fallthru
        _
      %p199 = scmp.le.s32.totalorder 1, %s16
      %p200 = scmp.lt.s32.totalorder %s16, 3
      %p201 = pnand %p199, %p200
      %p202 = pneg %p201
      // Predicated region
      $region29: #{decoder_forward.1} parent=5 // pred_check
        _
      $region30: #{decoder_forward.1} parent=5 // pred_check_branch
        %204 = sbr.rel (%p201) target = $region32
      $region31: #{decoder_forward.1} parent=5 // pred_region
        %s205 = ssub.s32 %s16, 1
        %s206 = sand.u32 %s41, 1
        %s207 = scalar_lea.sflag [#allocation3], %s206
        %s208 = sand.u32 %s41, 1
        %s209 = smul.addr %s208, 64
        %s210 = scalar_lea.vmem [#allocation2], %s209
        // Predicated region
        $region33: #{decoder_forward.1} parent=31 // pred_check
          %p211 = pneg %p54
        $region34: #{decoder_forward.1} parent=31 // pred_check_branch
          %213 = sbr.rel (%p211) target = $region36
        $region35: #{decoder_forward.1} parent=31 // pred_region
          %214 = dma.done %s207, 1024
        $region36: #{decoder_forward.1} parent=31 // pred_fallthru
          _
        // Predicated region
        $region37: #{decoder_forward.1} parent=31 // pred_check
          %p215 = pneg %p80
        $region38: #{decoder_forward.1} parent=31 // pred_check_branch
          %217 = sbr.rel (%p215) target = $region40
        $region39: #{decoder_forward.1} parent=31 // pred_region
          %218 = dma.done [#allocation6], 2048
        $region40: #{decoder_forward.1} parent=31 // pred_fallthru
          _
        // Predicated region
        $region41: #{decoder_forward.1} parent=31 // pred_check
          %p219 = pneg %p101
        $region42: #{decoder_forward.1} parent=31 // pred_check_branch
          %221 = sbr.rel (%p219) target = $region44
        $region43: #{decoder_forward.1} parent=31 // pred_region
          %222 = dma.done [#allocation6], 256
        $region44: #{decoder_forward.1} parent=31 // pred_fallthru
          _
        %s223 = sand.u32 %s41, 1
        %s224 = scalar_lea.sflag [#allocation3], %s223
        %s225 = sand.u32 %s41, 1
        %s226 = smul.addr %s225, 64
        %s227 = scalar_lea.vmem [#allocation2], %s226
        %p228 = pneg %p54
        %p229 = pneg %p51
        %p230 = pneg %p80
        %p231 = pneg %p77
        %p232 = pneg %p101
        %p233 = pneg %p98
        %p234 = pneg %p129
        %p235 = pneg %p126
        %s236 = sand.u32 %s116, 1
        %s237 = scalar_lea.sflag [#allocation4], %s236
        %s238 = sand.u32 %s116, 1
        %s239 = smul.addr %s238, 512
        %s240 = scalar_lea.vmem [#allocation8], %s239
        %s241 = smul.u32 4, %s25
        %s242 = smul.u32 16, %s26
        %s243 = smul.u32 4, %s25
        %s244 = smul.u32 16, %s26
        %v245 = vld [vmem:[%s210] sm:$0xff]
        %v246 = vld [vmem:[%s210 + $0x8] sm:$0xff]
        %v247 = vld [vmem:[%s210 + $0x10] sm:$0xff]
        %v248 = vld [vmem:[%s210 + $0x18] sm:$0xff]
        %v249 = vld [vmem:[%s210 + $0x20] sm:$0xff]
        %v250 = vld [vmem:[%s210 + $0x28] sm:$0xff]
        %v251 = vld [vmem:[%s210 + $0x30] sm:$0xff]
        %v252 = vld [vmem:[%s210 + $0x38] sm:$0xff]
        %v253 = vld [vmem:[#allocation7] sm:$0xff]
        %v254 = vld [vmem:[#allocation7 + $0x8] sm:$0xff]
        %vm255 = vcmask 130048
        %v257 = vsel %vm255, %v245, 0
        %v260 = vsel %vm255, %v246, 0
        %v263 = vsel %vm255, %v247, 0
        %v266 = vsel %vm255, %v248, 0
        %v269 = vsel %vm255, %v249, 0
        %v272 = vsel %vm255, %v250, 0
        %v275 = vsel %vm255, %v251, 0
        %v278 = vsel %vm255, %v252, 0
        %280 = vmatprep.subr.mxu0 0.0
        %281 = vmatpush1.msra.mxu0 %v253
        %282 = vmatprep.subr.mxu0 0.0
        %283 = vmatpush1.msra.mxu0 %v254
        %284 = vmatprep.subr.mxu0 0.0
        %285 = vmatpush1.msra.mxu0 0.0
        %286 = vmatprep.subr.mxu0 0.0
        %287 = vmatpush1.msra.mxu0 0.0
        %288 = vmatprep.subr.mxu0 0.0
        %289 = vmatpush1.msra.mxu0 0.0
        %290 = vmatprep.subr.mxu0 0.0
        %291 = vmatpush1.msra.mxu0 0.0
        %292 = vmatprep.subr.mxu0 0.0
        %293 = vmatpush1.msra.mxu0 0.0
        %294 = vmatprep.subr.mxu0 0.0
        %295 = vmatpush1.msra.mxu0 0.0
        %296 = vmatprep.subr.mxu0 0.0
        %297 = vmatpush1.msra.mxu0 0.0
        %298 = vmatprep.subr.mxu0 0.0
        %299 = vmatpush1.msra.mxu0 0.0
        %300 = vmatprep.subr.mxu0 0.0
        %301 = vmatpush1.msra.mxu0 0.0
        %302 = vmatprep.subr.mxu0 0.0
        %303 = vmatpush1.msra.mxu0 0.0
        %304 = vmatprep.subr.mxu0 0.0
        %305 = vmatpush1.msra.mxu0 0.0
        %306 = vmatprep.subr.mxu0 0.0
        %307 = vmatpush1.msra.mxu0 0.0
        %308 = vmatprep.subr.mxu0 0.0
        %309 = vmatpush1.msra.mxu0 0.0
        %310 = vmatprep.subr.mxu0 0.0
        %311 = vmatpush1.msra.mxu0 0.0
        %312 = vmatprep.subr.mxu0 0.0
        %313 = vmatpush1.msra.mxu0 0.0
        %314 = vmatprep.subr.mxu0 0.0
        %315 = vmatpush1.msra.mxu0 0.0
        %316 = vmatprep.subr.mxu0 0.0
        %317 = vmatpush1.msra.mxu0 0.0
        %318 = vmatprep.subr.mxu0 0.0
        %319 = vmatpush1.msra.mxu0 0.0
        %320 = vmatprep.subr.mxu0 0.0
        %321 = vmatpush1.msra.mxu0 0.0
        %322 = vmatprep.subr.mxu0 0.0
        %323 = vmatpush1.msra.mxu0 0.0
        %324 = vmatprep.subr.mxu0 0.0
        %325 = vmatpush1.msra.mxu0 0.0
        %326 = vmatprep.subr.mxu0 0.0
        %327 = vmatpush1.msra.mxu0 0.0
        %328 = vmatprep.subr.mxu0 0.0
        %329 = vmatpush1.msra.mxu0 0.0
        %330 = vmatprep.subr.mxu0 0.0
        %331 = vmatpush1.msra.mxu0 0.0
        %332 = vmatprep.subr.mxu0 0.0
        %333 = vmatpush1.msra.mxu0 0.0
        %334 = vmatprep.subr.mxu0 0.0
        %335 = vmatpush1.msra.mxu0 0.0
        %336 = vmatprep.subr.mxu0 0.0
        %337 = vmatpush1.msra.mxu0 0.0
        %338 = vmatprep.subr.mxu0 0.0
        %339 = vmatpush1.msra.mxu0 0.0
        %340 = vmatprep.subr.mxu0 0.0
        %341 = vmatpush1.msra.mxu0 0.0
        %342 = vmatprep.subr.mxu0 0.0
        %343 = vmatpush1.msra.mxu0 0.0
        %344 = vmatprep.mubr.f32.mxu0 0.0
        %345 = vmatmul.mubr.f32.gmra.mrb[0].mxu0 %v257
        %v346 = vpop.f32.mrb[0].mxu0
        %v347 = vadd.f32 0.0, %v346
        %v348 = vpop.f32.mrb[0].mxu0
        %349 = vmatprep.mubr.f32.mxu0 0.0
        %350 = vmatmul.mubr.f32.gmra.mrb[0].mxu0 %v260
        %v351 = vpop.f32.mrb[0].mxu0
        %v352 = vadd.f32 0.0, %v351
        %v353 = vpop.f32.mrb[0].mxu0
        %354 = vmatprep.mubr.f32.mxu0 0.0
        %355 = vmatmul.mubr.f32.gmra.mrb[0].mxu0 %v263
        %v356 = vpop.f32.mrb[0].mxu0
        %v357 = vadd.f32 0.0, %v356
        %v358 = vpop.f32.mrb[0].mxu0
        %359 = vmatprep.mubr.f32.mxu0 0.0
        %360 = vmatmul.mubr.f32.gmra.mrb[0].mxu0 %v266
        %v361 = vpop.f32.mrb[0].mxu0
        %v362 = vadd.f32 0.0, %v361
        %v363 = vpop.f32.mrb[0].mxu0
        %364 = vmatprep.mubr.f32.mxu0 0.0
        %365 = vmatmul.mubr.f32.gmra.mrb[0].mxu0 %v269
        %v366 = vpop.f32.mrb[0].mxu0
        %v367 = vadd.f32 0.0, %v366
        %v368 = vpop.f32.mrb[0].mxu0
        %369 = vmatprep.mubr.f32.mxu0 0.0
        %370 = vmatmul.mubr.f32.gmra.mrb[0].mxu0 %v272
        %v371 = vpop.f32.mrb[0].mxu0
        %v372 = vadd.f32 0.0, %v371
        %v373 = vpop.f32.mrb[0].mxu0
        %374 = vmatprep.mubr.f32.mxu0 0.0
        %375 = vmatmul.mubr.f32.gmra.mrb[0].mxu0 %v275
        %v376 = vpop.f32.mrb[0].mxu0
        %v377 = vadd.f32 0.0, %v376
        %v378 = vpop.f32.mrb[0].mxu0
        %379 = vmatprep.mubr.f32.mxu0 0.0
        %380 = vmatmul.mubr.f32.gmra.mrb[0].mxu0 %v278
        %v381 = vpop.f32.mrb[0].mxu0
        %v382 = vadd.f32 0.0, %v381
        %v383 = vpop.f32.mrb[0].mxu0
        %384 = vdwg.mxu0
        %v385 = vld [vmem:[#allocation5] sm:$0xff]
        %v386 = vld [vmem:[#allocation5 + $0x8] sm:$0xff]
        %v387 = vld [vmem:[#allocation5 + $0x10] sm:$0xff]
        %v388 = vld [vmem:[#allocation5 + $0x18] sm:$0xff]
        %v389 = vld [vmem:[#allocation5 + $0x20] sm:$0xff]
        %v390 = vld [vmem:[#allocation5 + $0x28] sm:$0xff]
        %v391 = vld [vmem:[#allocation5 + $0x30] sm:$0xff]
        %v392 = vld [vmem:[#allocation5 + $0x38] sm:$0xff]
        %v393 = vld [vmem:[#allocation5 + $0x40] sm:$0xff]
        %v394 = vld [vmem:[#allocation5 + $0x48] sm:$0xff]
        %v395 = vld [vmem:[#allocation5 + $0x50] sm:$0xff]
        %v396 = vld [vmem:[#allocation5 + $0x58] sm:$0xff]
        %v397 = vld [vmem:[#allocation5 + $0x60] sm:$0xff]
        %v398 = vld [vmem:[#allocation5 + $0x68] sm:$0xff]
        %v399 = vld [vmem:[#allocation5 + $0x70] sm:$0xff]
        %v400 = vld [vmem:[#allocation5 + $0x78] sm:$0xff]
        %v402 = vsel %vm255, %v385, 0
        %v405 = vsel %vm255, %v386, 0
        %v408 = vsel %vm255, %v387, 0
        %v411 = vsel %vm255, %v388, 0
        %v414 = vsel %vm255, %v389, 0
        %v417 = vsel %vm255, %v390, 0
        %v420 = vsel %vm255, %v391, 0
        %v423 = vsel %vm255, %v392, 0
        %v426 = vsel %vm255, %v393, 0
        %v429 = vsel %vm255, %v394, 0
        %v432 = vsel %vm255, %v395, 0
        %v435 = vsel %vm255, %v396, 0
        %v438 = vsel %vm255, %v397, 0
        %v441 = vsel %vm255, %v398, 0
        %v444 = vsel %vm255, %v399, 0
        %v447 = vsel %vm255, %v400, 0
        %449 = vmatprep.subr.mxu0 0.0
        %450 = vmatpush1.msra.mxu0 %v347
        %451 = vmatprep.subr.mxu0 0.0
        %452 = vmatpush1.msra.mxu0 %v352
        %453 = vmatprep.subr.mxu0 0.0
        %454 = vmatpush1.msra.mxu0 0.0
        %455 = vmatprep.subr.mxu0 0.0
        %456 = vmatpush1.msra.mxu0 0.0
        %457 = vmatprep.subr.mxu0 0.0
        %458 = vmatpush1.msra.mxu0 0.0
        %459 = vmatprep.subr.mxu0 0.0
        %460 = vmatpush1.msra.mxu0 0.0
        %461 = vmatprep.subr.mxu0 0.0
        %462 = vmatpush1.msra.mxu0 0.0
        %463 = vmatprep.subr.mxu0 0.0
        %464 = vmatpush1.msra.mxu0 0.0
        %465 = vmatprep.subr.mxu0 0.0
        %466 = vmatpush1.msra.mxu0 0.0
        %467 = vmatprep.subr.mxu0 0.0
        %468 = vmatpush1.msra.mxu0 0.0
        %469 = vmatprep.subr.mxu0 0.0
        %470 = vmatpush1.msra.mxu0 0.0
        %471 = vmatprep.subr.mxu0 0.0
        %472 = vmatpush1.msra.mxu0 0.0
        %473 = vmatprep.subr.mxu0 0.0
        %474 = vmatpush1.msra.mxu0 0.0
        %475 = vmatprep.subr.mxu0 0.0
        %476 = vmatpush1.msra.mxu0 0.0
        %477 = vmatprep.subr.mxu0 0.0
        %478 = vmatpush1.msra.mxu0 0.0
        %479 = vmatprep.subr.mxu0 0.0
        %480 = vmatpush1.msra.mxu0 0.0
        %481 = vmatprep.subr.mxu0 0.0
        %482 = vmatpush1.msra.mxu0 0.0
        %483 = vmatprep.subr.mxu0 0.0
        %484 = vmatpush1.msra.mxu0 0.0
        %485 = vmatprep.subr.mxu0 0.0
        %486 = vmatpush1.msra.mxu0 0.0
        %487 = vmatprep.subr.mxu0 0.0
        %488 = vmatpush1.msra.mxu0 0.0
        %489 = vmatprep.subr.mxu0 0.0
        %490 = vmatpush1.msra.mxu0 0.0
        %491 = vmatprep.subr.mxu0 0.0
        %492 = vmatpush1.msra.mxu0 0.0
        %493 = vmatprep.subr.mxu0 0.0
        %494 = vmatpush1.msra.mxu0 0.0
        %495 = vmatprep.subr.mxu0 0.0
        %496 = vmatpush1.msra.mxu0 0.0
        %497 = vmatprep.subr.mxu0 0.0
        %498 = vmatpush1.msra.mxu0 0.0
        %499 = vmatprep.subr.mxu0 0.0
        %500 = vmatpush1.msra.mxu0 0.0
        %501 = vmatprep.subr.mxu0 0.0
        %502 = vmatpush1.msra.mxu0 0.0
        %503 = vmatprep.subr.mxu0 0.0
        %504 = vmatpush1.msra.mxu0 0.0
        %505 = vmatprep.subr.mxu0 0.0
        %506 = vmatpush1.msra.mxu0 0.0
        %507 = vmatprep.subr.mxu0 0.0
        %508 = vmatpush1.msra.mxu0 0.0
        %509 = vmatprep.subr.mxu0 0.0
        %510 = vmatpush1.msra.mxu0 0.0
        %511 = vmatprep.subr.mxu0 0.0
        %512 = vmatpush1.msra.mxu0 0.0
        %513 = vmatprep.mubr.f32.mxu0 0.0
        %514 = vmatmul.mubr.f32.gmra.mrb[0].mxu0 %v402
        %v515 = vpop.f32.mrb[0].mxu0
        %v516 = vadd.f32 0.0, %v515
        %v517 = vpop.f32.mrb[0].mxu0
        %518 = vmatprep.mubr.f32.mxu0 0.0
        %519 = vmatmul.mubr.f32.gmra.mrb[0].mxu0 %v405
        %v520 = vpop.f32.mrb[0].mxu0
        %v521 = vadd.f32 0.0, %v520
        %v522 = vpop.f32.mrb[0].mxu0
        %523 = vmatprep.mubr.f32.mxu0 0.0
        %524 = vmatmul.mubr.f32.gmra.mrb[0].mxu0 %v408
        %v525 = vpop.f32.mrb[0].mxu0
        %v526 = vadd.f32 0.0, %v525
        %v527 = vpop.f32.mrb[0].mxu0
        %528 = vmatprep.mubr.f32.mxu0 0.0
        %529 = vmatmul.mubr.f32.gmra.mrb[0].mxu0 %v411
        %v530 = vpop.f32.mrb[0].mxu0
        %v531 = vadd.f32 0.0, %v530
        %v532 = vpop.f32.mrb[0].mxu0
        %533 = vmatprep.mubr.f32.mxu0 0.0
        %534 = vmatmul.mubr.f32.gmra.mrb[0].mxu0 %v414
        %v535 = vpop.f32.mrb[0].mxu0
        %v536 = vadd.f32 0.0, %v535
        %v537 = vpop.f32.mrb[0].mxu0
        %538 = vmatprep.mubr.f32.mxu0 0.0
        %539 = vmatmul.mubr.f32.gmra.mrb[0].mxu0 %v417
        %v540 = vpop.f32.mrb[0].mxu0
        %v541 = vadd.f32 0.0, %v540
        %v542 = vpop.f32.mrb[0].mxu0
        %543 = vmatprep.mubr.f32.mxu0 0.0
        %544 = vmatmul.mubr.f32.gmra.mrb[0].mxu0 %v420
        %v545 = vpop.f32.mrb[0].mxu0
        %v546 = vadd.f32 0.0, %v545
        %v547 = vpop.f32.mrb[0].mxu0
        %548 = vmatprep.mubr.f32.mxu0 0.0
        %549 = vmatmul.mubr.f32.gmra.mrb[0].mxu0 %v423
        %v550 = vpop.f32.mrb[0].mxu0
        %v551 = vadd.f32 0.0, %v550
        %v552 = vpop.f32.mrb[0].mxu0
        %553 = vmatprep.mubr.f32.mxu0 0.0
        %554 = vmatmul.mubr.f32.gmra.mrb[0].mxu0 %v426
        %v555 = vpop.f32.mrb[0].mxu0
        %v556 = vadd.f32 0.0, %v555
        %v557 = vpop.f32.mrb[0].mxu0
        %558 = vmatprep.mubr.f32.mxu0 0.0
        %559 = vmatmul.mubr.f32.gmra.mrb[0].mxu0 %v429
        %v560 = vpop.f32.mrb[0].mxu0
        %v561 = vadd.f32 0.0, %v560
        %v562 = vpop.f32.mrb[0].mxu0
        %563 = vmatprep.mubr.f32.mxu0 0.0
        %564 = vmatmul.mubr.f32.gmra.mrb[0].mxu0 %v432
        %v565 = vpop.f32.mrb[0].mxu0
        %v566 = vadd.f32 0.0, %v565
        %v567 = vpop.f32.mrb[0].mxu0
        %568 = vmatprep.mubr.f32.mxu0 0.0
        %569 = vmatmul.mubr.f32.gmra.mrb[0].mxu0 %v435
        %v570 = vpop.f32.mrb[0].mxu0
        %v571 = vadd.f32 0.0, %v570
        %v572 = vpop.f32.mrb[0].mxu0
        %573 = vmatprep.mubr.f32.mxu0 0.0
        %574 = vmatmul.mubr.f32.gmra.mrb[0].mxu0 %v438
        %v575 = vpop.f32.mrb[0].mxu0
        %v576 = vadd.f32 0.0, %v575
        %v577 = vpop.f32.mrb[0].mxu0
        %578 = vmatprep.mubr.f32.mxu0 0.0
        %579 = vmatmul.mubr.f32.gmra.mrb[0].mxu0 %v441
        %v580 = vpop.f32.mrb[0].mxu0
        %v581 = vadd.f32 0.0, %v580
        %v582 = vpop.f32.mrb[0].mxu0
        %583 = vmatprep.mubr.f32.mxu0 0.0
        %584 = vmatmul.mubr.f32.gmra.mrb[0].mxu0 %v444
        %v585 = vpop.f32.mrb[0].mxu0
        %v586 = vadd.f32 0.0, %v585
        %v587 = vpop.f32.mrb[0].mxu0
        %588 = vmatprep.mubr.f32.mxu0 0.0
        %589 = vmatmul.mubr.f32.gmra.mrb[0].mxu0 %v447
        %v590 = vpop.f32.mrb[0].mxu0
        %v591 = vadd.f32 0.0, %v590
        %v592 = vpop.f32.mrb[0].mxu0
        %593 = vdwg.mxu0
        %594 = vmatprep.subr.mxu0 0.0
        %595 = vmatpush1.msra.mxu0 %v357
        %596 = vmatprep.subr.mxu0 0.0
        %597 = vmatpush1.msra.mxu0 %v362
        %598 = vmatprep.subr.mxu0 0.0
        %599 = vmatpush1.msra.mxu0 0.0
        %600 = vmatprep.subr.mxu0 0.0
        %601 = vmatpush1.msra.mxu0 0.0
        %602 = vmatprep.subr.mxu0 0.0
        %603 = vmatpush1.msra.mxu0 0.0
        %604 = vmatprep.subr.mxu0 0.0
        %605 = vmatpush1.msra.mxu0 0.0
        %606 = vmatprep.subr.mxu0 0.0
        %607 = vmatpush1.msra.mxu0 0.0
        %608 = vmatprep.subr.mxu0 0.0
        %609 = vmatpush1.msra.mxu0 0.0
        %610 = vmatprep.subr.mxu0 0.0
        %611 = vmatpush1.msra.mxu0 0.0
        %612 = vmatprep.subr.mxu0 0.0
        %613 = vmatpush1.msra.mxu0 0.0
        %614 = vmatprep.subr.mxu0 0.0
        %615 = vmatpush1.msra.mxu0 0.0
        %616 = vmatprep.subr.mxu0 0.0
        %617 = vmatpush1.msra.mxu0 0.0
        %618 = vmatprep.subr.mxu0 0.0
        %619 = vmatpush1.msra.mxu0 0.0
        %620 = vmatprep.subr.mxu0 0.0
        %621 = vmatpush1.msra.mxu0 0.0
        %622 = vmatprep.subr.mxu0 0.0
        %623 = vmatpush1.msra.mxu0 0.0
        %624 = vmatprep.subr.mxu0 0.0
        %625 = vmatpush1.msra.mxu0 0.0
        %626 = vmatprep.subr.mxu0 0.0
        %627 = vmatpush1.msra.mxu0 0.0
        %628 = vmatprep.subr.mxu0 0.0
        %629 = vmatpush1.msra.mxu0 0.0
        %630 = vmatprep.subr.mxu0 0.0
        %631 = vmatpush1.msra.mxu0 0.0
        %632 = vmatprep.subr.mxu0 0.0
        %633 = vmatpush1.msra.mxu0 0.0
        %634 = vmatprep.subr.mxu0 0.0
        %635 = vmatpush1.msra.mxu0 0.0
        %636 = vmatprep.subr.mxu0 0.0
        %637 = vmatpush1.msra.mxu0 0.0
        %638 = vmatprep.subr.mxu0 0.0
        %639 = vmatpush1.msra.mxu0 0.0
        %640 = vmatprep.subr.mxu0 0.0
        %641 = vmatpush1.msra.mxu0 0.0
        %642 = vmatprep.subr.mxu0 0.0
        %643 = vmatpush1.msra.mxu0 0.0
        %644 = vmatprep.subr.mxu0 0.0
        %645 = vmatpush1.msra.mxu0 0.0
        %646 = vmatprep.subr.mxu0 0.0
        %647 = vmatpush1.msra.mxu0 0.0
        %648 = vmatprep.subr.mxu0 0.0
        %649 = vmatpush1.msra.mxu0 0.0
        %650 = vmatprep.subr.mxu0 0.0
        %651 = vmatpush1.msra.mxu0 0.0
        %652 = vmatprep.subr.mxu0 0.0
        %653 = vmatpush1.msra.mxu0 0.0
        %654 = vmatprep.subr.mxu0 0.0
        %655 = vmatpush1.msra.mxu0 0.0
        %656 = vmatprep.subr.mxu0 0.0
        %657 = vmatpush1.msra.mxu0 0.0
        %658 = vmatprep.mubr.f32.mxu0 0.0
        %659 = vmatmul.mubr.f32.gmra.mrb[0].mxu0 %v402
        %v660 = vpop.f32.mrb[0].mxu0
        %v661 = vadd.f32 0.0, %v660
        %v662 = vpop.f32.mrb[0].mxu0
        %663 = vmatprep.mubr.f32.mxu0 0.0
        %664 = vmatmul.mubr.f32.gmra.mrb[0].mxu0 %v405
        %v665 = vpop.f32.mrb[0].mxu0
        %v666 = vadd.f32 0.0, %v665
        %v667 = vpop.f32.mrb[0].mxu0
        %668 = vmatprep.mubr.f32.mxu0 0.0
        %669 = vmatmul.mubr.f32.gmra.mrb[0].mxu0 %v408
        %v670 = vpop.f32.mrb[0].mxu0
        %v671 = vadd.f32 0.0, %v670
        %v672 = vpop.f32.mrb[0].mxu0
        %673 = vmatprep.mubr.f32.mxu0 0.0
        %674 = vmatmul.mubr.f32.gmra.mrb[0].mxu0 %v411
        %v675 = vpop.f32.mrb[0].mxu0
        %v676 = vadd.f32 0.0, %v675
        %v677 = vpop.f32.mrb[0].mxu0
        %678 = vmatprep.mubr.f32.mxu0 0.0
        %679 = vmatmul.mubr.f32.gmra.mrb[0].mxu0 %v414
        %v680 = vpop.f32.mrb[0].mxu0
        %v681 = vadd.f32 0.0, %v680
        %v682 = vpop.f32.mrb[0].mxu0
        %683 = vmatprep.mubr.f32.mxu0 0.0
        %684 = vmatmul.mubr.f32.gmra.mrb[0].mxu0 %v417
        %v685 = vpop.f32.mrb[0].mxu0
        %v686 = vadd.f32 0.0, %v685
        %v687 = vpop.f32.mrb[0].mxu0
        %688 = vmatprep.mubr.f32.mxu0 0.0
        %689 = vmatmul.mubr.f32.gmra.mrb[0].mxu0 %v420
        %v690 = vpop.f32.mrb[0].mxu0
        %v691 = vadd.f32 0.0, %v690
        %v692 = vpop.f32.mrb[0].mxu0
        %693 = vmatprep.mubr.f32.mxu0 0.0
        %694 = vmatmul.mubr.f32.gmra.mrb[0].mxu0 %v423
        %v695 = vpop.f32.mrb[0].mxu0
        %v696 = vadd.f32 0.0, %v695
        %v697 = vpop.f32.mrb[0].mxu0
        %698 = vmatprep.mubr.f32.mxu0 0.0
        %699 = vmatmul.mubr.f32.gmra.mrb[0].mxu0 %v426
        %v700 = vpop.f32.mrb[0].mxu0
        %v701 = vadd.f32 0.0, %v700
        %v702 = vpop.f32.mrb[0].mxu0
        %703 = vmatprep.mubr.f32.mxu0 0.0
        %704 = vmatmul.mubr.f32.gmra.mrb[0].mxu0 %v429
        %v705 = vpop.f32.mrb[0].mxu0
        %v706 = vadd.f32 0.0, %v705
        %v707 = vpop.f32.mrb[0].mxu0
        %708 = vmatprep.mubr.f32.mxu0 0.0
        %709 = vmatmul.mubr.f32.gmra.mrb[0].mxu0 %v432
        %v710 = vpop.f32.mrb[0].mxu0
        %v711 = vadd.f32 0.0, %v710
        %v712 = vpop.f32.mrb[0].mxu0
        %713 = vmatprep.mubr.f32.mxu0 0.0
        %714 = vmatmul.mubr.f32.gmra.mrb[0].mxu0 %v435
        %v715 = vpop.f32.mrb[0].mxu0
        %v716 = vadd.f32 0.0, %v715
        %v717 = vpop.f32.mrb[0].mxu0
        %718 = vmatprep.mubr.f32.mxu0 0.0
        %719 = vmatmul.mubr.f32.gmra.mrb[0].mxu0 %v438
        %v720 = vpop.f32.mrb[0].mxu0
        %v721 = vadd.f32 0.0, %v720
        %v722 = vpop.f32.mrb[0].mxu0
        %723 = vmatprep.mubr.f32.mxu0 0.0
        %724 = vmatmul.mubr.f32.gmra.mrb[0].mxu0 %v441
        %v725 = vpop.f32.mrb[0].mxu0
        %v726 = vadd.f32 0.0, %v725
        %v727 = vpop.f32.mrb[0].mxu0
        %728 = vmatprep.mubr.f32.mxu0 0.0
        %729 = vmatmul.mubr.f32.gmra.mrb[0].mxu0 %v444
        %v730 = vpop.f32.mrb[0].mxu0
        %v731 = vadd.f32 0.0, %v730
        %v732 = vpop.f32.mrb[0].mxu0
        %733 = vmatprep.mubr.f32.mxu0 0.0
        %734 = vmatmul.mubr.f32.gmra.mrb[0].mxu0 %v447
        %v735 = vpop.f32.mrb[0].mxu0
        %v736 = vadd.f32 0.0, %v735
        %v737 = vpop.f32.mrb[0].mxu0
        %738 = vdwg.mxu0
        %739 = vmatprep.subr.mxu0 0.0
        %740 = vmatpush1.msra.mxu0 %v367
        %741 = vmatprep.subr.mxu0 0.0
        %742 = vmatpush1.msra.mxu0 %v372
        %743 = vmatprep.subr.mxu0 0.0
        %744 = vmatpush1.msra.mxu0 0.0
        %745 = vmatprep.subr.mxu0 0.0
        %746 = vmatpush1.msra.mxu0 0.0
        %747 = vmatprep.subr.mxu0 0.0
        %748 = vmatpush1.msra.mxu0 0.0
        %749 = vmatprep.subr.mxu0 0.0
        %750 = vmatpush1.msra.mxu0 0.0
        %751 = vmatprep.subr.mxu0 0.0
        %752 = vmatpush1.msra.mxu0 0.0
        %753 = vmatprep.subr.mxu0 0.0
        %754 = vmatpush1.msra.mxu0 0.0
        %755 = vmatprep.subr.mxu0 0.0
        %756 = vmatpush1.msra.mxu0 0.0
        %757 = vmatprep.subr.mxu0 0.0
        %758 = vmatpush1.msra.mxu0 0.0
        %759 = vmatprep.subr.mxu0 0.0
        %760 = vmatpush1.msra.mxu0 0.0
        %761 = vmatprep.subr.mxu0 0.0
        %762 = vmatpush1.msra.mxu0 0.0
        %763 = vmatprep.subr.mxu0 0.0
        %764 = vmatpush1.msra.mxu0 0.0
        %765 = vmatprep.subr.mxu0 0.0
        %766 = vmatpush1.msra.mxu0 0.0
        %767 = vmatprep.subr.mxu0 0.0
        %768 = vmatpush1.msra.mxu0 0.0
        %769 = vmatprep.subr.mxu0 0.0
        %770 = vmatpush1.msra.mxu0 0.0
        %771 = vmatprep.subr.mxu0 0.0
        %772 = vmatpush1.msra.mxu0 0.0
        %773 = vmatprep.subr.mxu0 0.0
        %774 = vmatpush1.msra.mxu0 0.0
        %775 = vmatprep.subr.mxu0 0.0
        %776 = vmatpush1.msra.mxu0 0.0
        %777 = vmatprep.subr.mxu0 0.0
        %778 = vmatpush1.msra.mxu0 0.0
        %779 = vmatprep.subr.mxu0 0.0
        %780 = vmatpush1.msra.mxu0 0.0
        %781 = vmatprep.subr.mxu0 0.0
        %782 = vmatpush1.msra.mxu0 0.0
        %783 = vmatprep.subr.mxu0 0.0
        %784 = vmatpush1.msra.mxu0 0.0
        %785 = vmatprep.subr.mxu0 0.0
        %786 = vmatpush1.msra.mxu0 0.0
        %787 = vmatprep.subr.mxu0 0.0
        %788 = vmatpush1.msra.mxu0 0.0
        %789 = vmatprep.subr.mxu0 0.0
        %790 = vmatpush1.msra.mxu0 0.0
        %791 = vmatprep.subr.mxu0 0.0
        %792 = vmatpush1.msra.mxu0 0.0
        %793 = vmatprep.subr.mxu0 0.0
        %794 = vmatpush1.msra.mxu0 0.0
        %795 = vmatprep.subr.mxu0 0.0
        %796 = vmatpush1.msra.mxu0 0.0
        %797 = vmatprep.subr.mxu0 0.0
        %798 = vmatpush1.msra.mxu0 0.0
        %799 = vmatprep.subr.mxu0 0.0
        %800 = vmatpush1.msra.mxu0 0.0
        %801 = vmatprep.subr.mxu0 0.0
        %802 = vmatpush1.msra.mxu0 0.0
        %803 = vmatprep.mubr.f32.mxu0 0.0
        %804 = vmatmul.mubr.f32.gmra.mrb[0].mxu0 %v402
        %v805 = vpop.f32.mrb[0].mxu0
        %v806 = vadd.f32 0.0, %v805
        %v807 = vpop.f32.mrb[0].mxu0
        %808 = vmatprep.mubr.f32.mxu0 0.0
        %809 = vmatmul.mubr.f32.gmra.mrb[0].mxu0 %v405
        %v810 = vpop.f32.mrb[0].mxu0
        %v811 = vadd.f32 0.0, %v810
        %v812 = vpop.f32.mrb[0].mxu0
        %813 = vmatprep.mubr.f32.mxu0 0.0
        %814 = vmatmul.mubr.f32.gmra.mrb[0].mxu0 %v408
        %v815 = vpop.f32.mrb[0].mxu0
        %v816 = vadd.f32 0.0, %v815
        %v817 = vpop.f32.mrb[0].mxu0
        %818 = vmatprep.mubr.f32.mxu0 0.0
        %819 = vmatmul.mubr.f32.gmra.mrb[0].mxu0 %v411
        %v820 = vpop.f32.mrb[0].mxu0
        %v821 = vadd.f32 0.0, %v820
        %v822 = vpop.f32.mrb[0].mxu0
        %823 = vmatprep.mubr.f32.mxu0 0.0
        %824 = vmatmul.mubr.f32.gmra.mrb[0].mxu0 %v414
        %v825 = vpop.f32.mrb[0].mxu0
        %v826 = vadd.f32 0.0, %v825
        %v827 = vpop.f32.mrb[0].mxu0
        %828 = vmatprep.mubr.f32.mxu0 0.0
        %829 = vmatmul.mubr.f32.gmra.mrb[0].mxu0 %v417
        %v830 = vpop.f32.mrb[0].mxu0
        %v831 = vadd.f32 0.0, %v830
        %v832 = vpop.f32.mrb[0].mxu0
        %833 = vmatprep.mubr.f32.mxu0 0.0
        %834 = vmatmul.mubr.f32.gmra.mrb[0].mxu0 %v420
        %v835 = vpop.f32.mrb[0].mxu0
        %v836 = vadd.f32 0.0, %v835
        %v837 = vpop.f32.mrb[0].mxu0
        %838 = vmatprep.mubr.f32.mxu0 0.0
        %839 = vmatmul.mubr.f32.gmra.mrb[0].mxu0 %v423
        %v840 = vpop.f32.mrb[0].mxu0
        %v841 = vadd.f32 0.0, %v840
        %v842 = vpop.f32.mrb[0].mxu0
        %843 = vmatprep.mubr.f32.mxu0 0.0
        %844 = vmatmul.mubr.f32.gmra.mrb[0].mxu0 %v426
        %v845 = vpop.f32.mrb[0].mxu0
        %v846 = vadd.f32 0.0, %v845
        %v847 = vpop.f32.mrb[0].mxu0
        %848 = vmatprep.mubr.f32.mxu0 0.0
        %849 = vmatmul.mubr.f32.gmra.mrb[0].mxu0 %v429
        %v850 = vpop.f32.mrb[0].mxu0
        %v851 = vadd.f32 0.0, %v850
        %v852 = vpop.f32.mrb[0].mxu0
        %853 = vmatprep.mubr.f32.mxu0 0.0
        %854 = vmatmul.mubr.f32.gmra.mrb[0].mxu0 %v432
        %v855 = vpop.f32.mrb[0].mxu0
        %v856 = vadd.f32 0.0, %v855
        %v857 = vpop.f32.mrb[0].mxu0
        %858 = vmatprep.mubr.f32.mxu0 0.0
        %859 = vmatmul.mubr.f32.gmra.mrb[0].mxu0 %v435
        %v860 = vpop.f32.mrb[0].mxu0
        %v861 = vadd.f32 0.0, %v860
        %v862 = vpop.f32.mrb[0].mxu0
        %863 = vmatprep.mubr.f32.mxu0 0.0
        %864 = vmatmul.mubr.f32.gmra.mrb[0].mxu0 %v438
        %v865 = vpop.f32.mrb[0].mxu0
        %v866 = vadd.f32 0.0, %v865
        %v867 = vpop.f32.mrb[0].mxu0
        %868 = vmatprep.mubr.f32.mxu0 0.0
        %869 = vmatmul.mubr.f32.gmra.mrb[0].mxu0 %v441
        %v870 = vpop.f32.mrb[0].mxu0
        %v871 = vadd.f32 0.0, %v870
        %v872 = vpop.f32.mrb[0].mxu0
        %873 = vmatprep.mubr.f32.mxu0 0.0
        %874 = vmatmul.mubr.f32.gmra.mrb[0].mxu0 %v444
        %v875 = vpop.f32.mrb[0].mxu0
        %v876 = vadd.f32 0.0, %v875
        %v877 = vpop.f32.mrb[0].mxu0
        %878 = vmatprep.mubr.f32.mxu0 0.0
        %879 = vmatmul.mubr.f32.gmra.mrb[0].mxu0 %v447
        %v880 = vpop.f32.mrb[0].mxu0
        %v881 = vadd.f32 0.0, %v880
        %v882 = vpop.f32.mrb[0].mxu0
        %883 = vdwg.mxu0
        %884 = vmatprep.subr.mxu0 0.0
        %885 = vmatpush1.msra.mxu0 %v377
        %886 = vmatprep.subr.mxu0 0.0
        %887 = vmatpush1.msra.mxu0 %v382
        %888 = vmatprep.subr.mxu0 0.0
        %889 = vmatpush1.msra.mxu0 0.0
        %890 = vmatprep.subr.mxu0 0.0
        %891 = vmatpush1.msra.mxu0 0.0
        %892 = vmatprep.subr.mxu0 0.0
        %893 = vmatpush1.msra.mxu0 0.0
        %894 = vmatprep.subr.mxu0 0.0
        %895 = vmatpush1.msra.mxu0 0.0
        %896 = vmatprep.subr.mxu0 0.0
        %897 = vmatpush1.msra.mxu0 0.0
        %898 = vmatprep.subr.mxu0 0.0
        %899 = vmatpush1.msra.mxu0 0.0
        %900 = vmatprep.subr.mxu0 0.0
        %901 = vmatpush1.msra.mxu0 0.0
        %902 = vmatprep.subr.mxu0 0.0
        %903 = vmatpush1.msra.mxu0 0.0
        %904 = vmatprep.subr.mxu0 0.0
        %905 = vmatpush1.msra.mxu0 0.0
        %906 = vmatprep.subr.mxu0 0.0
        %907 = vmatpush1.msra.mxu0 0.0
        %908 = vmatprep.subr.mxu0 0.0
        %909 = vmatpush1.msra.mxu0 0.0
        %910 = vmatprep.subr.mxu0 0.0
        %911 = vmatpush1.msra.mxu0 0.0
        %912 = vmatprep.subr.mxu0 0.0
        %913 = vmatpush1.msra.mxu0 0.0
        %914 = vmatprep.subr.mxu0 0.0
        %915 = vmatpush1.msra.mxu0 0.0
        %916 = vmatprep.subr.mxu0 0.0
        %917 = vmatpush1.msra.mxu0 0.0
        %918 = vmatprep.subr.mxu0 0.0
        %919 = vmatpush1.msra.mxu0 0.0
        %920 = vmatprep.subr.mxu0 0.0
        %921 = vmatpush1.msra.mxu0 0.0
        %922 = vmatprep.subr.mxu0 0.0
        %923 = vmatpush1.msra.mxu0 0.0
        %924 = vmatprep.subr.mxu0 0.0
        %925 = vmatpush1.msra.mxu0 0.0
        %926 = vmatprep.subr.mxu0 0.0
        %927 = vmatpush1.msra.mxu0 0.0
        %928 = vmatprep.subr.mxu0 0.0
        %929 = vmatpush1.msra.mxu0 0.0
        %930 = vmatprep.subr.mxu0 0.0
        %931 = vmatpush1.msra.mxu0 0.0
        %932 = vmatprep.subr.mxu0 0.0
        %933 = vmatpush1.msra.mxu0 0.0
        %934 = vmatprep.subr.mxu0 0.0
        %935 = vmatpush1.msra.mxu0 0.0
        %936 = vmatprep.subr.mxu0 0.0
        %937 = vmatpush1.msra.mxu0 0.0
        %938 = vmatprep.subr.mxu0 0.0
        %939 = vmatpush1.msra.mxu0 0.0
        %940 = vmatprep.subr.mxu0 0.0
        %941 = vmatpush1.msra.mxu0 0.0
        %942 = vmatprep.subr.mxu0 0.0
        %943 = vmatpush1.msra.mxu0 0.0
        %944 = vmatprep.subr.mxu0 0.0
        %945 = vmatpush1.msra.mxu0 0.0
        %946 = vmatprep.subr.mxu0 0.0
        %947 = vmatpush1.msra.mxu0 0.0
        %948 = vmatprep.mubr.f32.mxu0 0.0
        %949 = vmatmul.mubr.f32.gmra.mrb[0].mxu0 %v402
        %v950 = vpop.f32.mrb[0].mxu0
        %v951 = vadd.f32 0.0, %v950
        %v952 = vpop.f32.mrb[0].mxu0
        %953 = vmatprep.mubr.f32.mxu0 0.0
        %954 = vmatmul.mubr.f32.gmra.mrb[0].mxu0 %v405
        %v955 = vpop.f32.mrb[0].mxu0
        %v956 = vadd.f32 0.0, %v955
        %v957 = vpop.f32.mrb[0].mxu0
        %958 = vmatprep.mubr.f32.mxu0 0.0
        %959 = vmatmul.mubr.f32.gmra.mrb[0].mxu0 %v408
        %v960 = vpop.f32.mrb[0].mxu0
        %v961 = vadd.f32 0.0, %v960
        %v962 = vpop.f32.mrb[0].mxu0
        %963 = vmatprep.mubr.f32.mxu0 0.0
        %964 = vmatmul.mubr.f32.gmra.mrb[0].mxu0 %v411
        %v965 = vpop.f32.mrb[0].mxu0
        %v966 = vadd.f32 0.0, %v965
        %v967 = vpop.f32.mrb[0].mxu0
        %968 = vmatprep.mubr.f32.mxu0 0.0
        %969 = vmatmul.mubr.f32.gmra.mrb[0].mxu0 %v414
        %v970 = vpop.f32.mrb[0].mxu0
        %v971 = vadd.f32 0.0, %v970
        %v972 = vpop.f32.mrb[0].mxu0
        %973 = vmatprep.mubr.f32.mxu0 0.0
        %974 = vmatmul.mubr.f32.gmra.mrb[0].mxu0 %v417
        %v975 = vpop.f32.mrb[0].mxu0
        %v976 = vadd.f32 0.0, %v975
        %v977 = vpop.f32.mrb[0].mxu0
        %978 = vmatprep.mubr.f32.mxu0 0.0
        %979 = vmatmul.mubr.f32.gmra.mrb[0].mxu0 %v420
        %v980 = vpop.f32.mrb[0].mxu0
        %v981 = vadd.f32 0.0, %v980
        %v982 = vpop.f32.mrb[0].mxu0
        %983 = vmatprep.mubr.f32.mxu0 0.0
        %984 = vmatmul.mubr.f32.gmra.mrb[0].mxu0 %v423
        %v985 = vpop.f32.mrb[0].mxu0
        %v986 = vadd.f32 0.0, %v985
        %v987 = vpop.f32.mrb[0].mxu0
        %988 = vmatprep.mubr.f32.mxu0 0.0
        %989 = vmatmul.mubr.f32.gmra.mrb[0].mxu0 %v426
        %v990 = vpop.f32.mrb[0].mxu0
        %v991 = vadd.f32 0.0, %v990
        %v992 = vpop.f32.mrb[0].mxu0
        %993 = vmatprep.mubr.f32.mxu0 0.0
        %994 = vmatmul.mubr.f32.gmra.mrb[0].mxu0 %v429
        %v995 = vpop.f32.mrb[0].mxu0
        %v996 = vadd.f32 0.0, %v995
        %v997 = vpop.f32.mrb[0].mxu0
        %998 = vmatprep.mubr.f32.mxu0 0.0
        %999 = vmatmul.mubr.f32.gmra.mrb[0].mxu0 %v432
        %v1000 = vpop.f32.mrb[0].mxu0
        %v1001 = vadd.f32 0.0, %v1000
        %v1002 = vpop.f32.mrb[0].mxu0
        %1003 = vmatprep.mubr.f32.mxu0 0.0
        %1004 = vmatmul.mubr.f32.gmra.mrb[0].mxu0 %v435
        %v1005 = vpop.f32.mrb[0].mxu0
        %v1006 = vadd.f32 0.0, %v1005
        %v1007 = vpop.f32.mrb[0].mxu0
        %1008 = vmatprep.mubr.f32.mxu0 0.0
        %1009 = vmatmul.mubr.f32.gmra.mrb[0].mxu0 %v438
        %v1010 = vpop.f32.mrb[0].mxu0
        %v1011 = vadd.f32 0.0, %v1010
        %v1012 = vpop.f32.mrb[0].mxu0
        %1013 = vmatprep.mubr.f32.mxu0 0.0
        %1014 = vmatmul.mubr.f32.gmra.mrb[0].mxu0 %v441
        %v1015 = vpop.f32.mrb[0].mxu0
        %v1016 = vadd.f32 0.0, %v1015
        %v1017 = vpop.f32.mrb[0].mxu0
        %1018 = vmatprep.mubr.f32.mxu0 0.0
        %1019 = vmatmul.mubr.f32.gmra.mrb[0].mxu0 %v444
        %v1020 = vpop.f32.mrb[0].mxu0
        %v1021 = vadd.f32 0.0, %v1020
        %v1022 = vpop.f32.mrb[0].mxu0
        %1023 = vmatprep.mubr.f32.mxu0 0.0
        %1024 = vmatmul.mubr.f32.gmra.mrb[0].mxu0 %v447
        %v1025 = vpop.f32.mrb[0].mxu0
        %v1026 = vadd.f32 0.0, %v1025
        %v1027 = vpop.f32.mrb[0].mxu0
        %1028 = vdwg.mxu0
        %1029 = vst [vmem:[%s240] sm:$0xff] %v516
        %1030 = vst [vmem:[%s240 + $0x8] sm:$0xff] %v521
        %1031 = vst [vmem:[%s240 + $0x10] sm:$0xff] %v526
        %1032 = vst [vmem:[%s240 + $0x18] sm:$0xff] %v531
        %1033 = vst [vmem:[%s240 + $0x20] sm:$0xff] %v536
        %1034 = vst [vmem:[%s240 + $0x28] sm:$0xff] %v541
        %1035 = vst [vmem:[%s240 + $0x30] sm:$0xff] %v546
        %1036 = vst [vmem:[%s240 + $0x38] sm:$0xff] %v551
        %1037 = vst [vmem:[%s240 + $0x40] sm:$0xff] %v556
        %1038 = vst [vmem:[%s240 + $0x48] sm:$0xff] %v561
        %1039 = vst [vmem:[%s240 + $0x50] sm:$0xff] %v566
        %1040 = vst [vmem:[%s240 + $0x58] sm:$0xff] %v571
        %1041 = vst [vmem:[%s240 + $0x60] sm:$0xff] %v576
        %1042 = vst [vmem:[%s240 + $0x68] sm:$0xff] %v581
        %1043 = vst [vmem:[%s240 + $0x70] sm:$0xff] %v586
        %1044 = vst [vmem:[%s240 + $0x78] sm:$0xff] %v591
        %1045 = vst [vmem:[%s240 + $0x80] sm:$0xff] %v661
        %1046 = vst [vmem:[%s240 + $0x88] sm:$0xff] %v666
        %1047 = vst [vmem:[%s240 + $0x90] sm:$0xff] %v671
        %1048 = vst [vmem:[%s240 + $0x98] sm:$0xff] %v676
        %1049 = vst [vmem:[%s240 + $0xa0] sm:$0xff] %v681
        %1050 = vst [vmem:[%s240 + $0xa8] sm:$0xff] %v686
        %1051 = vst [vmem:[%s240 + $0xb0] sm:$0xff] %v691
        %1052 = vst [vmem:[%s240 + $0xb8] sm:$0xff] %v696
        %1053 = vst [vmem:[%s240 + $0xc0] sm:$0xff] %v701
        %1054 = vst [vmem:[%s240 + $0xc8] sm:$0xff] %v706
        %1055 = vst [vmem:[%s240 + $0xd0] sm:$0xff] %v711
        %1056 = vst [vmem:[%s240 + $0xd8] sm:$0xff] %v716
        %1057 = vst [vmem:[%s240 + $0xe0] sm:$0xff] %v721
        %1058 = vst [vmem:[%s240 + $0xe8] sm:$0xff] %v726
        %1059 = vst [vmem:[%s240 + $0xf0] sm:$0xff] %v731
        %1060 = vst [vmem:[%s240 + $0xf8] sm:$0xff] %v736
        %1061 = vst [vmem:[%s240 + $0x100] sm:$0xff] %v806
        %1062 = vst [vmem:[%s240 + $0x108] sm:$0xff] %v811
        %1063 = vst [vmem:[%s240 + $0x110] sm:$0xff] %v816
        %1064 = vst [vmem:[%s240 + $0x118] sm:$0xff] %v821
        %1065 = vst [vmem:[%s240 + $0x120] sm:$0xff] %v826
        %1066 = vst [vmem:[%s240 + $0x128] sm:$0xff] %v831
        %1067 = vst [vmem:[%s240 + $0x130] sm:$0xff] %v836
        %1068 = vst [vmem:[%s240 + $0x138] sm:$0xff] %v841
        %1069 = vst [vmem:[%s240 + $0x140] sm:$0xff] %v846
        %1070 = vst [vmem:[%s240 + $0x148] sm:$0xff] %v851
        %1071 = vst [vmem:[%s240 + $0x150] sm:$0xff] %v856
        %1072 = vst [vmem:[%s240 + $0x158] sm:$0xff] %v861
        %1073 = vst [vmem:[%s240 + $0x160] sm:$0xff] %v866
        %1074 = vst [vmem:[%s240 + $0x168] sm:$0xff] %v871
        %1075 = vst [vmem:[%s240 + $0x170] sm:$0xff] %v876
        %1076 = vst [vmem:[%s240 + $0x178] sm:$0xff] %v881
        %1077 = vst [vmem:[%s240 + $0x180] sm:$0xff] %v951
        %1078 = vst [vmem:[%s240 + $0x188] sm:$0xff] %v956
        %1079 = vst [vmem:[%s240 + $0x190] sm:$0xff] %v961
        %1080 = vst [vmem:[%s240 + $0x198] sm:$0xff] %v966
        %1081 = vst [vmem:[%s240 + $0x1a0] sm:$0xff] %v971
        %1082 = vst [vmem:[%s240 + $0x1a8] sm:$0xff] %v976
        %1083 = vst [vmem:[%s240 + $0x1b0] sm:$0xff] %v981
        %1084 = vst [vmem:[%s240 + $0x1b8] sm:$0xff] %v986
        %1085 = vst [vmem:[%s240 + $0x1c0] sm:$0xff] %v991
        %1086 = vst [vmem:[%s240 + $0x1c8] sm:$0xff] %v996
        %1087 = vst [vmem:[%s240 + $0x1d0] sm:$0xff] %v1001
        %1088 = vst [vmem:[%s240 + $0x1d8] sm:$0xff] %v1006
        %1089 = vst [vmem:[%s240 + $0x1e0] sm:$0xff] %v1011
        %1090 = vst [vmem:[%s240 + $0x1e8] sm:$0xff] %v1016
        %1091 = vst [vmem:[%s240 + $0x1f0] sm:$0xff] %v1021
        %1092 = vst [vmem:[%s240 + $0x1f8] sm:$0xff] %v1026
        %s1093 = sand.u32 %s116, 1
        %s1094 = scalar_lea.sflag [#allocation4], %s1093
        %s1095 = sand.u32 %s116, 1
        %s1096 = smul.addr %s1095, 512
        %s1097 = scalar_lea.vmem [#allocation8], %s1096
        // Predicated region
        $region45: #{decoder_forward.1} parent=31 // pred_check
          %p1098 = pneg %p126
        $region46: #{decoder_forward.1} parent=31 // pred_check_branch
          %1100 = sbr.rel (%p1098) target = $region48
        $region47: #{decoder_forward.1} parent=31 // pred_region
          %s1101 = smul.u32 4, %s25
          %s1102 = smul.u32 16, %s26
          %s1104 = ssub.s32 8192, 8192
          %1105 = vsyncadd %s1094, %s1104
          %s1106 = smul.addr %s1101, 16
          %s1107 = sadd.s32 %s1102, %s1106
          %s1108 = smul.addr %s1107, 128
          %s1109 = scalar_lea.hbm %s3, %s1108
          %s1110 = sshll.u32 %s1097, 4
          %s1111 = int_to_ptr.vmem [resolvable:$true] %s1110
          %1116 = dma.vmem_to_hbm [thread:$0]  %s1111, 8192, %s1109, %s1094, 128, 128, 8
        $region48: #{decoder_forward.1} parent=31 // pred_fallthru
          _
      $region32: #{decoder_forward.1} parent=5 // pred_fallthru
        _
      %p1117 = scmp.le.s32.totalorder 2, %s16
      // Predicated region
      $region49: #{decoder_forward.1} parent=5 // pred_check
        %p1118 = pneg %p1117
      $region50: #{decoder_forward.1} parent=5 // pred_check_branch
        %1120 = sbr.rel (%p1118) target = $region52
      $region51: #{decoder_forward.1} parent=5 // pred_region
        %s1121 = ssub.s32 %s16, 2
        // Predicated region
        $region53: #{decoder_forward.1} parent=51 // pred_check
          %p1122 = pneg %p132
        $region54: #{decoder_forward.1} parent=51 // pred_check_branch
          %1124 = sbr.rel (%p1122) target = $region56
        $region55: #{decoder_forward.1} parent=51 // pred_region
          %s1125 = sand.u32 %s117, 1
          %s1126 = scalar_lea.sflag [#allocation4], %s1125
          %s1127 = sand.u32 %s117, 1
          %s1128 = smul.addr %s1127, 512
          %s1129 = scalar_lea.vmem [#allocation8], %s1128
          %1130 = dma.done %s1126, 8192
        $region56: #{decoder_forward.1} parent=51 // pred_fallthru
          _
      $region52: #{decoder_forward.1} parent=5 // pred_fallthru
        _
    $region6: #{decoder_forward.1} parent=1 // loop_footer
      %s20 = sadd.s32 1, %s16
    $region7: #{decoder_forward.1} parent=1 // loop_footer_branch
      %15 = sbr.rel target = $region3
    $region8: #{decoder_forward.1} parent=1 // loop_exit
      _
    %1131 = vsyncpa [#allocation3], 1
    %s1132 = scalar_lea.sflag [#allocation3], 1
    %1133 = vsyncpa %s1132, 1
    %1134 = vsyncpa [#allocation6], 1
    %1135 = vsyncpa [#allocation4], 1
    %s1136 = scalar_lea.sflag [#allocation4], 1
    %1137 = vsyncpa %s1136, 1

</llo_original>
